<compile_context>
chip_gen: v7x
topology: tpu7x:2x2x1
jax: 0.10.0
libtpu: 0.0.40
codegen_flags: <defaults>
</compile_context>

<pallas_src>
import functools

import jax
import jax.numpy as jnp
from jax.experimental import pallas as pl
from jax.experimental.pallas import tpu as pltpu


# ---------------------------------------------------------------------------
# Kernel
# ---------------------------------------------------------------------------
def _critic_kernel(s_ref, a_ref, w1s_ref, w1a_ref, b1_ref, w2_ref, b2_ref,
                   w3_ref, b3_ref, out_ref):
    # Layer 1 of both heads, stacked along lanes: (BT, 128).
    # state/action are fed separately (concat removed from the wrapper); the
    # two partial dots accumulate in f32.
    s = s_ref[...].astype(jnp.bfloat16)
    a = a_ref[...].astype(jnp.bfloat16)
    h1 = (jnp.dot(s, w1s_ref[...], preferred_element_type=jnp.float32)
          + jnp.dot(a, w1a_ref[...], preferred_element_type=jnp.float32)
          + b1_ref[...])
    h1 = jnp.maximum(h1, 0.0)                                   # f32 VPU ReLU

    # Layer 2 of both heads (block-diagonal keeps heads independent): (BT, 64)
    h2 = (jnp.dot(h1.astype(jnp.bfloat16), w2_ref[...],
                  preferred_element_type=jnp.float32) + b2_ref[...])
    h2 = jnp.maximum(h2, 0.0)

    # Output layer, zero-padded to 128 lanes: lane 0 = q1, lane 1 = q2,
    # lanes 2..127 are exact zeros -> unmasked lane-dense store.
    out_ref[...] = (jnp.dot(h2.astype(jnp.bfloat16), w3_ref[...],
                            preferred_element_type=jnp.float32) + b3_ref[...])


# ---------------------------------------------------------------------------
# Wrapper
# ---------------------------------------------------------------------------
def _round_up(x, m):
    return (x + m - 1) // m * m


@functools.partial(jax.jit, static_argnames=())
def critic_forward(state, action, packed):
    """state: (B, process_history, feat) f32, action: (B, action_dim) f32
    -> (q1, q2), each (B, 1) f32."""
    B = state.shape[0]
    s_flat = state.reshape(B, -1).astype(jnp.float32)           # (B, 42)
    a_flat = action.astype(jnp.float32)                         # (B, 1)
    Ds = s_flat.shape[1]
    Da = a_flat.shape[1]

    # Batch tiling: pad B to a sublane multiple; tile in 128-row blocks when
    # the batch is large so the grid can be megacore-sharded (v7x).
    BT = 128 if B >= 128 else _round_up(B, 8)
    Bp = _round_up(B, BT)
    if Bp != B:
        s_flat = jnp.pad(s_flat, ((0, Bp - B), (0, 0)))
        a_flat = jnp.pad(a_flat, ((0, Bp - B), (0, 0)))
    n_tiles = Bp // BT

    w1s, w1a = packed["w1s"], packed["w1a"]
    b1, w2, b2, w3, b3 = (packed["b1"], packed["w2"], packed["b2"],
                          packed["w3"], packed["b3"])
    H1 = w1s.shape[1]          # 128
    H2 = w2.shape[1]           # 64
    OUT = w3.shape[1]          # 128 (lane-padded)

    flops = 2 * Bp * (Ds * H1 + Da * H1 + H1 * H2 + H2 * OUT)
    bytes_accessed = (4 * (s_flat.size + a_flat.size + Bp * OUT)
                      + 2 * (w1s.size + w1a.size + w2.size + w3.size)
                      + 4 * (b1.size + b2.size + b3.size))

    batch_spec = lambda shape: pl.BlockSpec(shape, lambda i: (i, 0))
    const_spec = lambda shape: pl.BlockSpec(shape, lambda i: (0, 0))

    q = pl.pallas_call(
        _critic_kernel,
        out_shape=jax.ShapeDtypeStruct((Bp, OUT), jnp.float32),
        grid=(n_tiles,),
        in_specs=[
            batch_spec((BT, Ds)),            # state (flattened)
            batch_spec((BT, Da)),            # action
            const_spec(w1s.shape),           # W1 (state part), bf16
            const_spec(w1a.shape),           # W1 (action part), bf16
            const_spec(b1.shape),            # b1, f32
            const_spec(w2.shape),            # W2 block-diag, bf16
            const_spec(b2.shape),            # b2, f32
            const_spec(w3.shape),            # W3 lane-padded, bf16
            const_spec(b3.shape),            # b3 lane-padded, f32
        ],
        out_specs=batch_spec((BT, OUT)),
        compiler_params=pltpu.CompilerParams(
            dimension_semantics=("parallel",)),
        cost_estimate=pl.CostEstimate(flops=flops, transcendentals=0,
                                      bytes_accessed=bytes_accessed),
    )(s_flat, a_flat, w1s, w1a, b1, w2, b2, w3, b3)

    return q[:B, 0:1], q[:B, 1:2]


# ---------------------------------------------------------------------------
# Parameter construction / packing
# ---------------------------------------------------------------------------
def init_raw_params(key, in_dim, h1=64, h2=32):
    """Per-layer weights in JAX (in, out) layout, separate heads."""
    ks = jax.random.split(key, 12)
    s = 0.1

    def lin(kw, kb, din, dout):
        return (s * jax.random.normal(kw, (din, dout), jnp.float32),
                s * jax.random.normal(kb, (dout,), jnp.float32))

    w1a, b1a = lin(ks[0], ks[1], in_dim, h1)    # l1
    w2a, b2a = lin(ks[2], ks[3], h1, h2)        # l2
    w3a, b3a = lin(ks[4], ks[5], h2, 1)         # l3
    w1b, b1b = lin(ks[6], ks[7], in_dim, h1)    # l4
    w2b, b2b = lin(ks[8], ks[9], h1, h2)        # l5
    w3b, b3b = lin(ks[10], ks[11], h2, 1)       # l6
    return dict(w1a=w1a, b1a=b1a, w2a=w2a, b2a=b2a, w3a=w3a, b3a=b3a,
                w1b=w1b, b1b=b1b, w2b=w2b, b2b=b2b, w3b=w3b, b3b=b3b)


def pack_params(raw, state_flat_dim, h1=64, h2=32, out_lanes=128):
    """Fuse the two Q heads along the lane dimension.

    W1 is split into a state part and an action part (no wrapper concat);
    W2/W3 are block-diagonal; W3/b3 are zero-padded to `out_lanes` so the
    final store is lane-dense (q1 -> lane 0, q2 -> lane 1).  Weights bf16,
    biases f32.
    """
    w1_full = jnp.concatenate([raw["w1a"], raw["w1b"]], axis=1)   # (D, 2*h1)
    w1s = w1_full[:state_flat_dim].astype(jnp.bfloat16)           # (42, 128)
    w1a = w1_full[state_flat_dim:].astype(jnp.bfloat16)           # (1, 128)
    b1 = jnp.concatenate([raw["b1a"], raw["b1b"]])[None, :]       # (1, 128) f32

    w2 = jnp.zeros((2 * h1, 2 * h2), jnp.float32)
    w2 = w2.at[:h1, :h2].set(raw["w2a"]).at[h1:, h2:].set(raw["w2b"])
    w2 = w2.astype(jnp.bfloat16)                                  # (128, 64)
    b2 = jnp.concatenate([raw["b2a"], raw["b2b"]])[None, :]       # (1, 64) f32

    w3 = jnp.zeros((2 * h2, out_lanes), jnp.float32)
    w3 = w3.at[:h2, 0:1].set(raw["w3a"]).at[h2:, 1:2].set(raw["w3b"])
    w3 = w3.astype(jnp.bfloat16)                                  # (64, 128)
    b3 = jnp.zeros((1, out_lanes), jnp.float32)
    b3 = b3.at[0, 0].set(raw["b3a"][0]).at[0, 1].set(raw["b3b"][0])

    return dict(w1s=w1s, w1a=w1a, b1=b1, w2=w2, b2=b2, w3=w3, b3=b3)


def critic_reference(state, action, raw):
    """Pure-JAX f32 reference of the PyTorch Critic.forward."""
    B = state.shape[0]
    sa = jnp.concatenate([state.reshape(B, -1), action], axis=1)

    def head(w1, b1, w2, b2, w3, b3):
        h = jax.nn.relu(sa @ w1 + b1)
        h = jax.nn.relu(h @ w2 + b2)
        return h @ w3 + b3

    q1 = head(raw["w1a"], raw["b1a"], raw["w2a"], raw["b2a"],
              raw["w3a"], raw["b3a"])
    q2 = head(raw["w1b"], raw["b1b"], raw["w2b"], raw["b2b"],
              raw["w3b"], raw["b3b"])
    return q1, q2


if __name__ == "__main__":
    # env: feat = mv(1) + pv(n_dim=20) = 21, process_history = 2, action_dim = 1
    B, PROCESS_HISTORY, FEAT, ACTION_DIM = 2, 2, 21, 1
    STATE_FLAT = PROCESS_HISTORY * FEAT                 # 42
    IN_DIM = STATE_FLAT + ACTION_DIM                    # 43

    key = jax.random.PRNGKey(0)
    k_s, k_a, k_p = jax.random.split(key, 3)
    state = jax.random.normal(k_s, (B, PROCESS_HISTORY, FEAT), jnp.float32)
    action = jax.random.uniform(k_a, (B, ACTION_DIM), jnp.float32)

    raw = init_raw_params(k_p, IN_DIM)
    packed = pack_params(raw, STATE_FLAT)

    q1, q2 = critic_forward(state, action, packed)
    q1 = jax.block_until_ready(q1)
    q2 = jax.block_until_ready(q2)

    r1, r2 = critic_reference(state, action, raw)
    r1 = jax.block_until_ready(r1)
    r2 = jax.block_until_ready(r2)

    assert q1.shape == (B, 1) and q2.shape == (B, 1)
    # bf16 matmul operands (f32 accumulation) -> loosened tolerance vs f32 ref.
    assert jnp.allclose(q1, r1, atol=2e-2, rtol=2e-2), (q1, r1)
    assert jnp.allclose(q2, r2, atol=2e-2, rtol=2e-2), (q2, r2)

    print("KERNEL_OK")
</pallas_src>

<mosaic_0001>
module attributes {stable_mosaic.version = 11 : i64} {
  func.func @_critic_kernel(%arg0: i32, %arg1: memref<8x42xf32, #tpu.memory_space<vmem>>, %arg2: memref<8x1xf32, #tpu.memory_space<vmem>>, %arg3: memref<42x128xbf16, #tpu.memory_space<vmem>>, %arg4: memref<1x128xbf16, #tpu.memory_space<vmem>>, %arg5: memref<1x128xf32, #tpu.memory_space<vmem>>, %arg6: memref<128x64xbf16, #tpu.memory_space<vmem>>, %arg7: memref<1x64xf32, #tpu.memory_space<vmem>>, %arg8: memref<64x128xbf16, #tpu.memory_space<vmem>>, %arg9: memref<1x128xf32, #tpu.memory_space<vmem>>, %arg10: memref<8x128xf32, #tpu.memory_space<vmem>>) attributes {dimension_semantics = [#tpu.dimension_semantics<parallel>], iteration_bounds = array<i64: 1>, scalar_prefetch = 0 : i64, scratch_operands = 0 : i64, tpu.core_type = #tpu.core_type<tc>, window_params = [{transform_indices = @transform_0, window_bounds = array<i64: 8, 42>}, {transform_indices = @transform_1, window_bounds = array<i64: 8, 1>}, {pipeline_mode = #tpu.pipeline_mode<synchronous>, transform_indices = @transform_2, window_bounds = array<i64: 42, 128>}, {pipeline_mode = #tpu.pipeline_mode<synchronous>, transform_indices = @transform_3, window_bounds = array<i64: 1, 128>}, {pipeline_mode = #tpu.pipeline_mode<synchronous>, transform_indices = @transform_4, window_bounds = array<i64: 1, 128>}, {pipeline_mode = #tpu.pipeline_mode<synchronous>, transform_indices = @transform_5, window_bounds = array<i64: 128, 64>}, {pipeline_mode = #tpu.pipeline_mode<synchronous>, transform_indices = @transform_6, window_bounds = array<i64: 1, 64>}, {pipeline_mode = #tpu.pipeline_mode<synchronous>, transform_indices = @transform_7, window_bounds = array<i64: 64, 128>}, {pipeline_mode = #tpu.pipeline_mode<synchronous>, transform_indices = @transform_8, window_bounds = array<i64: 1, 128>}, {transform_indices = @transform_9, window_bounds = array<i64: 8, 128>}]} {
    %c0 = arith.constant 0 : index
    %c0_0 = arith.constant 0 : index
    %0 = vector.load %arg1[%c0, %c0_0] : memref<8x42xf32, #tpu.memory_space<vmem>>, vector<8x42xf32>
    %1 = arith.truncf %0 : vector<8x42xf32> to vector<8x42xbf16>
    %c0_1 = arith.constant 0 : index
    %c0_2 = arith.constant 0 : index
    %2 = vector.load %arg2[%c0_1, %c0_2] : memref<8x1xf32, #tpu.memory_space<vmem>>, vector<8x1xf32>
    %3 = arith.truncf %2 : vector<8x1xf32> to vector<8x1xbf16>
    %c0_3 = arith.constant 0 : index
    %c0_4 = arith.constant 0 : index
    %4 = vector.load %arg3[%c0_3, %c0_4] : memref<42x128xbf16, #tpu.memory_space<vmem>>, vector<42x128xbf16>
    %cst = arith.constant dense<0.000000e+00> : vector<8x128xf32>
    %5 = tpu.matmul %1, %4, %cst {dimension_numbers = #tpu.dot_dimension_numbers<[1], [0], [0], [1], [0, 0, 1, 1], [], []>} : vector<8x42xbf16>, vector<42x128xbf16>, vector<8x128xf32> -> vector<8x128xf32>
    %c0_5 = arith.constant 0 : index
    %c0_6 = arith.constant 0 : index
    %6 = vector.load %arg4[%c0_5, %c0_6] : memref<1x128xbf16, #tpu.memory_space<vmem>>, vector<1x128xbf16>
    %cst_7 = arith.constant dense<0.000000e+00> : vector<8x128xf32>
    %7 = tpu.matmul %3, %6, %cst_7 {dimension_numbers = #tpu.dot_dimension_numbers<[1], [0], [0], [1], [0, 0, 1, 1], [], []>} : vector<8x1xbf16>, vector<1x128xbf16>, vector<8x128xf32> -> vector<8x128xf32>
    %8 = arith.addf %5, %7 : vector<8x128xf32>
    %c0_8 = arith.constant 0 : index
    %c0_9 = arith.constant 0 : index
    %9 = vector.load %arg5[%c0_8, %c0_9] : memref<1x128xf32, #tpu.memory_space<vmem>>, vector<1x128xf32>
    %10 = vector.broadcast %9 : vector<1x128xf32> to vector<8x128xf32>
    %11 = arith.addf %8, %10 : vector<8x128xf32>
    %cst_10 = arith.constant 0.000000e+00 : f32
    %12 = vector.broadcast %cst_10 : f32 to vector<8x128xf32>
    %13 = arith.maximumf %11, %12 : vector<8x128xf32>
    %14 = arith.truncf %13 : vector<8x128xf32> to vector<8x128xbf16>
    %c0_11 = arith.constant 0 : index
    %c0_12 = arith.constant 0 : index
    %15 = vector.load %arg6[%c0_11, %c0_12] : memref<128x64xbf16, #tpu.memory_space<vmem>>, vector<128x64xbf16>
    %cst_13 = arith.constant dense<0.000000e+00> : vector<8x64xf32>
    %16 = tpu.matmul %14, %15, %cst_13 {dimension_numbers = #tpu.dot_dimension_numbers<[1], [0], [0], [1], [0, 0, 1, 1], [], []>} : vector<8x128xbf16>, vector<128x64xbf16>, vector<8x64xf32> -> vector<8x64xf32>
    %c0_14 = arith.constant 0 : index
    %c0_15 = arith.constant 0 : index
    %17 = vector.load %arg7[%c0_14, %c0_15] : memref<1x64xf32, #tpu.memory_space<vmem>>, vector<1x64xf32>
    %18 = vector.broadcast %17 : vector<1x64xf32> to vector<8x64xf32>
    %19 = arith.addf %16, %18 : vector<8x64xf32>
    %cst_16 = arith.constant 0.000000e+00 : f32
    %20 = vector.broadcast %cst_16 : f32 to vector<8x64xf32>
    %21 = arith.maximumf %19, %20 : vector<8x64xf32>
    %22 = arith.truncf %21 : vector<8x64xf32> to vector<8x64xbf16>
    %c0_17 = arith.constant 0 : index
    %c0_18 = arith.constant 0 : index
    %23 = vector.load %arg8[%c0_17, %c0_18] : memref<64x128xbf16, #tpu.memory_space<vmem>>, vector<64x128xbf16>
    %cst_19 = arith.constant dense<0.000000e+00> : vector<8x128xf32>
    %24 = tpu.matmul %22, %23, %cst_19 {dimension_numbers = #tpu.dot_dimension_numbers<[1], [0], [0], [1], [0, 0, 1, 1], [], []>} : vector<8x64xbf16>, vector<64x128xbf16>, vector<8x128xf32> -> vector<8x128xf32>
    %c0_20 = arith.constant 0 : index
    %c0_21 = arith.constant 0 : index
    %25 = vector.load %arg9[%c0_20, %c0_21] : memref<1x128xf32, #tpu.memory_space<vmem>>, vector<1x128xf32>
    %26 = vector.broadcast %25 : vector<1x128xf32> to vector<8x128xf32>
    %27 = arith.addf %24, %26 : vector<8x128xf32>
    %c0_22 = arith.constant 0 : index
    %c0_23 = arith.constant 0 : index
    %28 = vector.load %arg10[%c0_22, %c0_23] : memref<8x128xf32, #tpu.memory_space<vmem>>, vector<8x128xf32>
    tpu.vector_store %arg10[%c0_22, %c0_23], %27 {strides = array<i32>} : memref<8x128xf32, #tpu.memory_space<vmem>>, vector<8x128xf32>,
    return
  }
  func.func @transform_0(%arg0: i32) -> (i32, i32) {
    %c0_i32 = arith.constant 0 : i32
    %c0_i32_0 = arith.constant 0 : i32
    return %arg0, %c0_i32 : i32, i32
  }
  func.func @transform_1(%arg0: i32) -> (i32, i32) {
    %c0_i32 = arith.constant 0 : i32
    %c0_i32_0 = arith.constant 0 : i32
    return %arg0, %c0_i32 : i32, i32
  }
  func.func @transform_2(%arg0: i32) -> (i32, i32) {
    %c0_i32 = arith.constant 0 : i32
    %c0_i32_0 = arith.constant 0 : i32
    %c0_i32_1 = arith.constant 0 : i32
    return %c0_i32, %c0_i32_0 : i32, i32
  }
  func.func @transform_3(%arg0: i32) -> (i32, i32) {
    %c0_i32 = arith.constant 0 : i32
    %c0_i32_0 = arith.constant 0 : i32
    %c0_i32_1 = arith.constant 0 : i32
    return %c0_i32, %c0_i32_0 : i32, i32
  }
  func.func @transform_4(%arg0: i32) -> (i32, i32) {
    %c0_i32 = arith.constant 0 : i32
    %c0_i32_0 = arith.constant 0 : i32
    %c0_i32_1 = arith.constant 0 : i32
    return %c0_i32, %c0_i32_0 : i32, i32
  }
  func.func @transform_5(%arg0: i32) -> (i32, i32) {
    %c0_i32 = arith.constant 0 : i32
    %c0_i32_0 = arith.constant 0 : i32
    %c0_i32_1 = arith.constant 0 : i32
    return %c0_i32, %c0_i32_0 : i32, i32
  }
  func.func @transform_6(%arg0: i32) -> (i32, i32) {
    %c0_i32 = arith.constant 0 : i32
    %c0_i32_0 = arith.constant 0 : i32
    %c0_i32_1 = arith.constant 0 : i32
    return %c0_i32, %c0_i32_0 : i32, i32
  }
  func.func @transform_7(%arg0: i32) -> (i32, i32) {
    %c0_i32 = arith.constant 0 : i32
    %c0_i32_0 = arith.constant 0 : i32
    %c0_i32_1 = arith.constant 0 : i32
    return %c0_i32, %c0_i32_0 : i32, i32
  }
  func.func @transform_8(%arg0: i32) -> (i32, i32) {
    %c0_i32 = arith.constant 0 : i32
    %c0_i32_0 = arith.constant 0 : i32
    %c0_i32_1 = arith.constant 0 : i32
    return %c0_i32, %c0_i32_0 : i32, i32
  }
  func.func @transform_9(%arg0: i32) -> (i32, i32) {
    %c0_i32 = arith.constant 0 : i32
    %c0_i32_0 = arith.constant 0 : i32
    return %arg0, %c0_i32 : i32, i32
  }
}

</mosaic_0001>

<llo_original>
// kernel: critic_forward.1
$region0: #{critic_forward.1}
  #allocation0 [shape = 'u32[]', space=smem, size = 0x4, offset = 0x4, fixed_abs, tag = 'smem constant byte address 0x4 - core index']
  #allocation1 [shape = 'u32[144,128]{1,0:T(1,128)}', space=vmem, size = 0x12000, scoped, tag = 'internal scratch']
  %s0 = inlined_call_operand.vmem [shape: f32[8,42], index: 0, kind: input, shape index: {}]
  %s1 = inlined_call_operand.vmem [shape: f32[8,1], index: 1, kind: input, shape index: {}]
  %s2 = inlined_call_operand.vmem [shape: bf16[42,128], index: 2, kind: input, shape index: {}]
  %s3 = inlined_call_operand.vmem [shape: bf16[1,128], index: 3, kind: input, shape index: {}]
  %s4 = inlined_call_operand.vmem [shape: f32[1,128], index: 4, kind: input, shape index: {}]
  %s5 = inlined_call_operand.vmem [shape: bf16[128,64], index: 5, kind: input, shape index: {}]
  %s6 = inlined_call_operand.vmem [shape: f32[1,64], index: 6, kind: input, shape index: {}]
  %s7 = inlined_call_operand.vmem [shape: bf16[64,128], index: 7, kind: input, shape index: {}]
  %s8 = inlined_call_operand.vmem [shape: f32[1,128], index: 8, kind: input, shape index: {}]
  %s9 = inlined_call_operand.vmem [shape: f32[8,128], index: 9, kind: output, shape index: {}]
  %s10 = sld [smem:[#allocation0]]
  $region46: #{critic_forward.1} parent=0
    _
  %s12 = ssub.s32 1, %s10
  %s13 = scalar_select 0, %s12, %s10
  // Predicated region
  $region2: #{critic_forward.1} parent=0 // pred_check
    _
  $region3: #{critic_forward.1} parent=0 // pred_check_branch
    %15 = sbr.rel (0) target = $region5
  $region4: #{critic_forward.1} parent=0 // pred_region
    _
  $region5: #{critic_forward.1} parent=0 // pred_fallthru
    _
  // Predicated region
  $region6: #{critic_forward.1} parent=0 // pred_check
    _
  $region7: #{critic_forward.1} parent=0 // pred_check_branch
    %17 = sbr.rel (0) target = $region9
  $region8: #{critic_forward.1} parent=0 // pred_region
    _
  $region9: #{critic_forward.1} parent=0 // pred_fallthru
    _
  // Predicated region
  $region10: #{critic_forward.1} parent=0 // pred_check
    _
  $region11: #{critic_forward.1} parent=0 // pred_check_branch
    %19 = sbr.rel (0) target = $region13
  $region12: #{critic_forward.1} parent=0 // pred_region
    _
  $region13: #{critic_forward.1} parent=0 // pred_fallthru
    _
  // Predicated region
  $region14: #{critic_forward.1} parent=0 // pred_check
    _
  $region15: #{critic_forward.1} parent=0 // pred_check_branch
    %21 = sbr.rel (0) target = $region17
  $region16: #{critic_forward.1} parent=0 // pred_region
    _
  $region17: #{critic_forward.1} parent=0 // pred_fallthru
    _
  // Predicated region
  $region18: #{critic_forward.1} parent=0 // pred_check
    _
  $region19: #{critic_forward.1} parent=0 // pred_check_branch
    %23 = sbr.rel (0) target = $region21
  $region20: #{critic_forward.1} parent=0 // pred_region
    _
  $region21: #{critic_forward.1} parent=0 // pred_fallthru
    _
  // Predicated region
  $region22: #{critic_forward.1} parent=0 // pred_check
    _
  $region23: #{critic_forward.1} parent=0 // pred_check_branch
    %25 = sbr.rel (0) target = $region25
  $region24: #{critic_forward.1} parent=0 // pred_region
    _
  $region25: #{critic_forward.1} parent=0 // pred_fallthru
    _
  // Predicated region
  $region26: #{critic_forward.1} parent=0 // pred_check
    _
  $region27: #{critic_forward.1} parent=0 // pred_check_branch
    %27 = sbr.rel (0) target = $region29
  $region28: #{critic_forward.1} parent=0 // pred_region
    _
  $region29: #{critic_forward.1} parent=0 // pred_fallthru
    _
  // Predicated region
  $region30: #{critic_forward.1} parent=0 // pred_check
    _
  $region31: #{critic_forward.1} parent=0 // pred_check_branch
    %29 = sbr.rel (0) target = $region33
  $region32: #{critic_forward.1} parent=0 // pred_region
    _
  $region33: #{critic_forward.1} parent=0 // pred_fallthru
    _
  // Predicated region
  $region34: #{critic_forward.1} parent=0 // pred_check
    _
  $region35: #{critic_forward.1} parent=0 // pred_check_branch
    %31 = sbr.rel (0) target = $region37
  $region36: #{critic_forward.1} parent=0 // pred_region
    _
  $region37: #{critic_forward.1} parent=0 // pred_fallthru
    _
  %v33 = vld [vmem:[%s0] sm:$0xff]
  %v34 = vpack.c.bf16 %v33, %v33
  %v35 = vld [vmem:[%s1] sm:$0xff]
  %v36 = vpack.c.bf16 %v35, %v35
  %v37 = vld [vmem:[%s2] sm:$0xf]
  %v38 = vld [vmem:[%s2 + $0x4] sm:$0xf]
  %v39 = vld [vmem:[%s2 + $0x8] sm:$0xf]
  %v40 = vld [vmem:[%s2 + $0xc] sm:$0xf]
  %v41 = vld [vmem:[%s2 + $0x10] sm:$0xf]
  %v42 = vld [vmem:[%s2 + $0x14] sm:$0x1]
  %v43 = vld [vmem:[%s3] sm:$0x1]
  %vm44 = vcmask 7168
  %v46 = vsel %vm44, %v36, 0
  %vm48 = vcmask 1040384
  %v49 = vsel 0, 4294967295, 65535
  %v50 = vsel %vm48, %v49, 0
  %v52 = vand.u32 %v43, %v50
  %54 = vmatprep.subr.bf16.mxu0 0
  %55 = vmatpush1.bf16.msra.mxu0 %v52
  %56 = vmatprep.subr.bf16.mxu0 0
  %57 = vmatpush1.bf16.msra.mxu0 0
  %58 = vmatprep.subr.bf16.mxu0 0
  %59 = vmatpush1.bf16.msra.mxu0 0
  %60 = vmatprep.subr.bf16.mxu0 0
  %61 = vmatpush1.bf16.msra.mxu0 0
  %62 = vmatprep.subr.bf16.mxu0 0
  %63 = vmatpush1.bf16.msra.mxu0 0
  %64 = vmatprep.subr.bf16.mxu0 0
  %65 = vmatpush1.bf16.msra.mxu0 0
  %66 = vmatprep.subr.bf16.mxu0 0
  %67 = vmatpush1.bf16.msra.mxu0 0
  %68 = vmatprep.subr.bf16.mxu0 0
  %69 = vmatpush1.bf16.msra.mxu0 0
  %70 = vmatprep.subr.bf16.mxu0 0
  %71 = vmatpush1.bf16.msra.mxu0 0
  %72 = vmatprep.subr.bf16.mxu0 0
  %73 = vmatpush1.bf16.msra.mxu0 0
  %74 = vmatprep.subr.bf16.mxu0 0
  %75 = vmatpush1.bf16.msra.mxu0 0
  %76 = vmatprep.subr.bf16.mxu0 0
  %77 = vmatpush1.bf16.msra.mxu0 0
  %78 = vmatprep.subr.bf16.mxu0 0
  %79 = vmatpush1.bf16.msra.mxu0 0
  %80 = vmatprep.subr.bf16.mxu0 0
  %81 = vmatpush1.bf16.msra.mxu0 0
  %82 = vmatprep.subr.bf16.mxu0 0
  %83 = vmatpush1.bf16.msra.mxu0 0
  %84 = vmatprep.subr.bf16.mxu0 0
  %85 = vmatpush1.bf16.msra.mxu0 0
  %86 = vmatprep.mubr.bf16.mxu0 0
  %87 = vmatmul.mubr.bf16.gmra.mrb[0].mxu0 %v46
  %v88 = vpop.f32.mrb[0].mxu0
  %v89 = vadd.f32 0.0, %v88
  %v90 = vpop.f32.mrb[0].mxu0
  %v91 = vpop.f32.mrb[0].mxu0
  %v92 = vpop.f32.mrb[0].mxu0
  %93 = vdwg.mxu0
  %v100 = vunpack.c.l.b16 %v37
  %v101 = vunpack.c.l.b16 %v38
  %v102 = vunpack.c.l.b16 %v39
  %v103 = vunpack.c.l.b16 %v40
  %v104 = vunpack.c.l.b16 %v41
  %v105 = vunpack.c.l.b16 %v42
  %v106 = vpack.c.b16 %v101, %v100
  %v107 = vpack.c.b16 %v103, %v102
  %v108 = vpack.c.b16 %v105, %v104
  %vm111 = vcmask 343040
  %v113 = vsel %vm111, %v34, 0
  %vm115 = vcmask 1044480
  %v117 = vsel %vm115, %v108, 0
  %119 = vmatprep.subr.bf16.mxu0 0
  %120 = vmatpush1.bf16.msra.mxu0 %v106
  %121 = vmatprep.subr.bf16.mxu0 0
  %122 = vmatpush1.bf16.msra.mxu0 %v107
  %123 = vmatprep.subr.bf16.mxu0 0
  %124 = vmatpush1.bf16.msra.mxu0 %v117
  %125 = vmatprep.subr.bf16.mxu0 0
  %126 = vmatpush1.bf16.msra.mxu0 0
  %127 = vmatprep.subr.bf16.mxu0 0
  %128 = vmatpush1.bf16.msra.mxu0 0
  %129 = vmatprep.subr.bf16.mxu0 0
  %130 = vmatpush1.bf16.msra.mxu0 0
  %131 = vmatprep.subr.bf16.mxu0 0
  %132 = vmatpush1.bf16.msra.mxu0 0
  %133 = vmatprep.subr.bf16.mxu0 0
  %134 = vmatpush1.bf16.msra.mxu0 0
  %135 = vmatprep.subr.bf16.mxu0 0
  %136 = vmatpush1.bf16.msra.mxu0 0
  %137 = vmatprep.subr.bf16.mxu0 0
  %138 = vmatpush1.bf16.msra.mxu0 0
  %139 = vmatprep.subr.bf16.mxu0 0
  %140 = vmatpush1.bf16.msra.mxu0 0
  %141 = vmatprep.subr.bf16.mxu0 0
  %142 = vmatpush1.bf16.msra.mxu0 0
  %143 = vmatprep.subr.bf16.mxu0 0
  %144 = vmatpush1.bf16.msra.mxu0 0
  %145 = vmatprep.subr.bf16.mxu0 0
  %146 = vmatpush1.bf16.msra.mxu0 0
  %147 = vmatprep.subr.bf16.mxu0 0
  %148 = vmatpush1.bf16.msra.mxu0 0
  %149 = vmatprep.subr.bf16.mxu0 0
  %150 = vmatpush1.bf16.msra.mxu0 0
  %151 = vmatprep.mubr.bf16.mxu0 0
  %152 = vmatmul.mubr.bf16.gmra.mrb[0].mxu0 %v113
  %v153 = vpop.f32.mrb[0].mxu0
  %v154 = vadd.f32 %v89, %v153
  %v155 = vpop.f32.mrb[0].mxu0
  %v156 = vpop.f32.mrb[0].mxu0
  %v157 = vpop.f32.mrb[0].mxu0
  %158 = vdwg.mxu0
  %v159 = vld [vmem:[%s4] sm:$0x1]
  %v161 = vlaneseq
  %v162 = vshrl.u32 %v161, 7
  %v163 = vsub.s32 0, %v162
  %v164 = vrot.slane %v159, %v163
  %v166 = vadd.f32 %v154, %v164
  %v167 = vmax.f32 %v166, 0.0
  %v168 = vpack.c.bf16 %v167, %v167
  %v169 = vld [vmem:[%s5] sm:$0xf]
  %v170 = vld [vmem:[%s5 + $0x4] sm:$0xf]
  %v171 = vld [vmem:[%s5 + $0x8] sm:$0xf]
  %v172 = vld [vmem:[%s5 + $0xc] sm:$0xf]
  %v173 = vld [vmem:[%s5 + $0x10] sm:$0xf]
  %v174 = vld [vmem:[%s5 + $0x14] sm:$0xf]
  %v175 = vld [vmem:[%s5 + $0x18] sm:$0xf]
  %v176 = vld [vmem:[%s5 + $0x1c] sm:$0xf]
  %v177 = vld [vmem:[%s5 + $0x20] sm:$0xf]
  %v178 = vld [vmem:[%s5 + $0x24] sm:$0xf]
  %v179 = vld [vmem:[%s5 + $0x28] sm:$0xf]
  %v180 = vld [vmem:[%s5 + $0x2c] sm:$0xf]
  %v181 = vld [vmem:[%s5 + $0x30] sm:$0xf]
  %v182 = vld [vmem:[%s5 + $0x34] sm:$0xf]
  %v183 = vld [vmem:[%s5 + $0x38] sm:$0xf]
  %v184 = vld [vmem:[%s5 + $0x3c] sm:$0xf]
  %v185 = vld [vmem:[%s6] sm:$0x1]
  %v187 = vlaneseq
  %v188 = vshrl.u32 %v187, 7
  %v189 = vsub.s32 0, %v188
  %v190 = vrot.slane %v185, %v189
  %v208 = vunpack.c.l.b16 %v169
  %v209 = vunpack.c.l.b16 %v170
  %v210 = vunpack.c.l.b16 %v171
  %v211 = vunpack.c.l.b16 %v172
  %v212 = vunpack.c.l.b16 %v173
  %v213 = vunpack.c.l.b16 %v174
  %v214 = vunpack.c.l.b16 %v175
  %v215 = vunpack.c.l.b16 %v176
  %v216 = vunpack.c.l.b16 %v177
  %v217 = vunpack.c.l.b16 %v178
  %v218 = vunpack.c.l.b16 %v179
  %v219 = vunpack.c.l.b16 %v180
  %v220 = vunpack.c.l.b16 %v181
  %v221 = vunpack.c.l.b16 %v182
  %v222 = vunpack.c.l.b16 %v183
  %v223 = vunpack.c.l.b16 %v184
  %v224 = vpack.c.b16 %v209, %v208
  %v225 = vpack.c.b16 %v211, %v210
  %v226 = vpack.c.b16 %v213, %v212
  %v227 = vpack.c.b16 %v215, %v214
  %v228 = vpack.c.b16 %v217, %v216
  %v229 = vpack.c.b16 %v219, %v218
  %v230 = vpack.c.b16 %v221, %v220
  %v231 = vpack.c.b16 %v223, %v222
  %240 = vmatprep.subr.bf16.mxu0 0
  %241 = vmatpush1.bf16.msra.mxu0 %v224
  %242 = vmatprep.subr.bf16.mxu0 0
  %243 = vmatpush1.bf16.msra.mxu0 %v225
  %244 = vmatprep.subr.bf16.mxu0 0
  %245 = vmatpush1.bf16.msra.mxu0 %v226
  %246 = vmatprep.subr.bf16.mxu0 0
  %247 = vmatpush1.bf16.msra.mxu0 %v227
  %248 = vmatprep.subr.bf16.mxu0 0
  %249 = vmatpush1.bf16.msra.mxu0 %v228
  %250 = vmatprep.subr.bf16.mxu0 0
  %251 = vmatpush1.bf16.msra.mxu0 %v229
  %252 = vmatprep.subr.bf16.mxu0 0
  %253 = vmatpush1.bf16.msra.mxu0 %v230
  %254 = vmatprep.subr.bf16.mxu0 0
  %255 = vmatpush1.bf16.msra.mxu0 %v231
  %256 = vmatprep.subr.bf16.mxu0 0
  %257 = vmatpush1.bf16.msra.mxu0 0
  %258 = vmatprep.subr.bf16.mxu0 0
  %259 = vmatpush1.bf16.msra.mxu0 0
  %260 = vmatprep.subr.bf16.mxu0 0
  %261 = vmatpush1.bf16.msra.mxu0 0
  %262 = vmatprep.subr.bf16.mxu0 0
  %263 = vmatpush1.bf16.msra.mxu0 0
  %264 = vmatprep.subr.bf16.mxu0 0
  %265 = vmatpush1.bf16.msra.mxu0 0
  %266 = vmatprep.subr.bf16.mxu0 0
  %267 = vmatpush1.bf16.msra.mxu0 0
  %268 = vmatprep.subr.bf16.mxu0 0
  %269 = vmatpush1.bf16.msra.mxu0 0
  %270 = vmatprep.subr.bf16.mxu0 0
  %271 = vmatpush1.bf16.msra.mxu0 0
  %272 = vmatprep.mubr.bf16.mxu0 0
  %273 = vmatmul.mubr.bf16.gmra.mrb[0].mxu0 %v168
  %v274 = vpop.f32.mrb[0].mxu0
  %v275 = vadd.f32 %v190, %v274
  %v276 = vpop.f32.mrb[0].mxu0
  %v277 = vpop.f32.mrb[0].mxu0
  %v278 = vpop.f32.mrb[0].mxu0
  %279 = vdwg.mxu0
  %v280 = vmax.f32 %v275, 0.0
  %v281 = vpack.c.bf16 %v280, %v280
  %v282 = vld [vmem:[%s7] sm:$0xf]
  %v283 = vld [vmem:[%s7 + $0x4] sm:$0xf]
  %v284 = vld [vmem:[%s7 + $0x8] sm:$0xf]
  %v285 = vld [vmem:[%s7 + $0xc] sm:$0xf]
  %v286 = vld [vmem:[%s7 + $0x10] sm:$0xf]
  %v287 = vld [vmem:[%s7 + $0x14] sm:$0xf]
  %v288 = vld [vmem:[%s7 + $0x18] sm:$0xf]
  %v289 = vld [vmem:[%s7 + $0x1c] sm:$0xf]
  %v290 = vld [vmem:[%s8] sm:$0x1]
  %v292 = vlaneseq
  %v293 = vshrl.u32 %v292, 7
  %v294 = vsub.s32 0, %v293
  %v295 = vrot.slane %v290, %v294
  %v305 = vunpack.c.l.b16 %v282
  %v306 = vunpack.c.l.b16 %v283
  %v307 = vunpack.c.l.b16 %v284
  %v308 = vunpack.c.l.b16 %v285
  %v309 = vunpack.c.l.b16 %v286
  %v310 = vunpack.c.l.b16 %v287
  %v311 = vunpack.c.l.b16 %v288
  %v312 = vunpack.c.l.b16 %v289
  %v313 = vpack.c.b16 %v306, %v305
  %v314 = vpack.c.b16 %v308, %v307
  %v315 = vpack.c.b16 %v310, %v309
  %v316 = vpack.c.b16 %v312, %v311
  %vm321 = vcmask 523264
  %v323 = vsel %vm321, %v281, 0
  %325 = vmatprep.subr.bf16.mxu0 0
  %326 = vmatpush1.bf16.msra.mxu0 %v313
  %327 = vmatprep.subr.bf16.mxu0 0
  %328 = vmatpush1.bf16.msra.mxu0 %v314
  %329 = vmatprep.subr.bf16.mxu0 0
  %330 = vmatpush1.bf16.msra.mxu0 %v315
  %331 = vmatprep.subr.bf16.mxu0 0
  %332 = vmatpush1.bf16.msra.mxu0 %v316
  %333 = vmatprep.subr.bf16.mxu0 0
  %334 = vmatpush1.bf16.msra.mxu0 0
  %335 = vmatprep.subr.bf16.mxu0 0
  %336 = vmatpush1.bf16.msra.mxu0 0
  %337 = vmatprep.subr.bf16.mxu0 0
  %338 = vmatpush1.bf16.msra.mxu0 0
  %339 = vmatprep.subr.bf16.mxu0 0
  %340 = vmatpush1.bf16.msra.mxu0 0
  %341 = vmatprep.subr.bf16.mxu0 0
  %342 = vmatpush1.bf16.msra.mxu0 0
  %343 = vmatprep.subr.bf16.mxu0 0
  %344 = vmatpush1.bf16.msra.mxu0 0
  %345 = vmatprep.subr.bf16.mxu0 0
  %346 = vmatpush1.bf16.msra.mxu0 0
  %347 = vmatprep.subr.bf16.mxu0 0
  %348 = vmatpush1.bf16.msra.mxu0 0
  %349 = vmatprep.subr.bf16.mxu0 0
  %350 = vmatpush1.bf16.msra.mxu0 0
  %351 = vmatprep.subr.bf16.mxu0 0
  %352 = vmatpush1.bf16.msra.mxu0 0
  %353 = vmatprep.subr.bf16.mxu0 0
  %354 = vmatpush1.bf16.msra.mxu0 0
  %355 = vmatprep.subr.bf16.mxu0 0
  %356 = vmatpush1.bf16.msra.mxu0 0
  %357 = vmatprep.mubr.bf16.mxu0 0
  %358 = vmatmul.mubr.bf16.gmra.mrb[0].mxu0 %v323
  %v359 = vpop.f32.mrb[0].mxu0
  %v360 = vadd.f32 %v295, %v359
  %v361 = vpop.f32.mrb[0].mxu0
  %v362 = vpop.f32.mrb[0].mxu0
  %v363 = vpop.f32.mrb[0].mxu0
  %364 = vdwg.mxu0
  %365 = vst [vmem:[%s9] sm:$0xff] %v360
  // Predicated region
  $region38: #{critic_forward.1} parent=0 // pred_check
    _
  $region39: #{critic_forward.1} parent=0 // pred_check_branch
    %367 = sbr.rel (0) target = $region41
  $region40: #{critic_forward.1} parent=0 // pred_region
    _
  $region41: #{critic_forward.1} parent=0 // pred_fallthru
    _
  // Predicated region
  $region42: #{critic_forward.1} parent=0 // pred_check
    _
  $region43: #{critic_forward.1} parent=0 // pred_check_branch
    %369 = sbr.rel (0) target = $region45
  $region44: #{critic_forward.1} parent=0 // pred_region
    _
  $region45: #{critic_forward.1} parent=0 // pred_fallthru
    _

</llo_original>
